<compile_context>
chip_gen: v7x
topology: tpu7x:2x2x1
jax: 0.10.0
libtpu: 0.0.40
codegen_flags: <defaults>
</compile_context>

<pallas_src>
import functools

import jax
import jax.numpy as jnp
import numpy as np
from jax import lax
from jax.experimental import pallas as pl
from jax.experimental.pallas import tpu as pltpu


def _upsample_kernel(p_ref, w_ref, b_ref, o_ref):
    """One batch-image grid step.

    p_ref: (1, A*A*Cin, L_pad)       im2col'd padded input (bf16)
    w_ref: (S*S*Cout, A*A*Cin)       packed per-phase/per-tap weights (bf16)
    b_ref: (S*S*Cout, 1)             bias, repeated per phase (f32)
    o_ref: (1, S*S*Cout, L_pad)      all-phase wide output (f32)
    """
    acc = lax.dot_general(
        w_ref[...], p_ref[0],
        dimension_numbers=(((1,), (0,)), ((), ())),
        preferred_element_type=jnp.float32)              # (S*S*Cout, L_pad) f32
    o_ref[0] = jnp.maximum(acc + b_ref[...], 0.0)


def _packed_phase_weights(weight, K, S, A, PL):
    """(Cin, Cout, K, K) ConvTranspose2d weights -> (S*S*Cout, A*A*Cin) bf16.

    Row block (rh*S+rw), tap column block (ah*A+aw) holds
    weight[:, :, kh, kw]^T with kh = rh + (PL-ah)*S, kw = rw + (PL-aw)*S
    (zeros when (kh, kw) falls outside [0, K))."""
    Cin, Cout = weight.shape[0], weight.shape[1]
    zero = jnp.zeros((Cout, Cin), weight.dtype)
    rows = []
    for rh in range(S):
        for rw in range(S):
            taps = []
            for ah in range(A):
                kh = rh + (PL - ah) * S
                for aw in range(A):
                    kw = rw + (PL - aw) * S
                    if 0 <= kh < K and 0 <= kw < K:
                        taps.append(jnp.transpose(weight[:, :, kh, kw]))
                    else:
                        taps.append(zero)
            rows.append(jnp.concatenate(taps, axis=1))   # (Cout, A*A*Cin)
    return jnp.concatenate(rows, axis=0).astype(jnp.bfloat16)


@functools.partial(jax.jit, static_argnums=(3, 4))
def upsample_forward(x_nchw, weight, bias, kernel_size, stride):
    """x_nchw: (N, Cin, H, W) f32; weight: (Cin, Cout, K, K); bias: (Cout,).
    Returns relu(conv_transpose2d(reflection_pad(x, K//2), W, b, stride)) as
    (N, Cout, Ho, Wo) f32 with Ho = (H + 2*(K//2) - 1)*stride + K."""
    K, S = kernel_size, stride
    refl = K // 2
    N, Cin, H, W = x_nchw.shape
    Cout = weight.shape[1]

    PL = (K - 1) // S                     # left zero-pad per spatial dim
    A = -(-K // S)                        # taps per phase per dim = ceil(K/S)
    Hp, Wp = H + 2 * refl, W + 2 * refl
    Ho, Wo = (Hp - 1) * S + K, (Wp - 1) * S + K
    Qh, Qw = -(-Ho // S), -(-Wo // S)     # per-phase output extents
    padRh = max(0, (Qh + A - 1) - (PL + Hp))   # right zero-pads so valid reads
    padRw = max(0, (Qw + A - 1) - (PL + Wp))   #   never wrap to the next row
    Hpp, Wpp = PL + Hp + padRh, PL + Wp + padRw

    L = Qh * Wpp                          # flattened wide-output length
    L_pad = -(-L // 128) * 128            # lane-dense (multiple of 128) stores

    # --- wrapper glue (channel-major throughout, no NCHW<->NHWC transposes) ---
    # reflection pad + zero pad, flatten spatial dims.
    xr = jnp.pad(x_nchw, ((0, 0), (0, 0), (refl, refl), (refl, refl)),
                 mode="reflect")
    xp = jnp.pad(xr, ((0, 0), (0, 0), (PL, padRh), (PL, padRw)))
    xf = xp.reshape(N, Cin, Hpp * Wpp)
    # Pad the flat buffer so every tap slice of length L_pad stays in bounds
    # (Pallas performs no VMEM bounds check; never rely on OOB reads).
    need_flat = (A - 1) * Wpp + (A - 1) + L_pad
    if need_flat > Hpp * Wpp:
        xf = jnp.pad(xf, ((0, 0), (0, 0), (0, need_flat - Hpp * Wpp)))
    # im2col: the A*A shifted rows, contiguous and lane-aligned for the kernel.
    patches = jnp.stack(
        [lax.slice_in_dim(xf, ah * Wpp + aw, ah * Wpp + aw + L_pad, axis=2)
         for ah in range(A) for aw in range(A)],
        axis=1)                                         # (N, A*A, Cin, L_pad)
    patches = patches.reshape(N, A * A * Cin, L_pad).astype(jnp.bfloat16)

    w_all = _packed_phase_weights(weight, K, S, A, PL)  # (S*S*Cout, A*A*Cin)
    b_all = jnp.tile(bias, S * S).reshape(S * S * Cout, 1).astype(jnp.float32)

    SSCout, AACin = S * S * Cout, A * A * Cin

    wide = pl.pallas_call(
        _upsample_kernel,
        out_shape=jax.ShapeDtypeStruct((N, SSCout, L_pad), jnp.float32),
        grid_spec=pltpu.PrefetchScalarGridSpec(
            num_scalar_prefetch=0,
            grid=(N,),
            in_specs=[
                pl.BlockSpec((1, AACin, L_pad), lambda n: (n, 0, 0)),
                pl.BlockSpec((SSCout, AACin), lambda n: (0, 0)),
                pl.BlockSpec((SSCout, 1), lambda n: (0, 0)),
            ],
            out_specs=pl.BlockSpec((1, SSCout, L_pad), lambda n: (n, 0, 0)),
        ),
        compiler_params=pltpu.CompilerParams(
            dimension_semantics=("parallel",)),
    )(patches, w_all, b_all)

    # Pixel-shuffle the S*S phase outputs back to (N, Cout, Ho, Wo):
    # drop the lane padding and wide junk columns, interleave phases, crop.
    ph = wide.reshape(N, S, S, Cout, L_pad)[..., :L]
    ph = ph.reshape(N, S, S, Cout, Qh, Wpp)[..., :Qw]   # (N,S,S,Cout,Qh,Qw)
    y = jnp.transpose(ph, (0, 3, 4, 1, 5, 2))           # (N,Cout,Qh,S,Qw,S)
    return y.reshape(N, Cout, Qh * S, Qw * S)[:, :, :Ho, :Wo]


def _reference(x_nchw, weight, bias, kernel_size, stride, cast_bf16):
    """Pure-JAX reference: reflection pad -> ConvTranspose2d -> ReLU."""
    K, S = kernel_size, stride
    refl = K // 2
    xr = jnp.pad(x_nchw, ((0, 0), (0, 0), (refl, refl), (refl, refl)),
                 mode="reflect")
    wf = jnp.transpose(weight[:, :, ::-1, ::-1], (2, 3, 0, 1))   # (K,K,Cin,Cout)
    if cast_bf16:
        xr = xr.astype(jnp.bfloat16)
        wf = wf.astype(jnp.bfloat16)
    y = lax.conv_general_dilated(
        xr, wf, window_strides=(1, 1),
        padding=[(K - 1, K - 1), (K - 1, K - 1)],
        lhs_dilation=(S, S),
        dimension_numbers=("NCHW", "HWIO", "NCHW"),
        preferred_element_type=jnp.float32)
    y = y + bias[None, :, None, None].astype(jnp.float32)
    return jnp.maximum(y, 0.0)


if __name__ == "__main__":
    in_channels, out_channels, kernel_size, stride = 4, 8, 3, 2

    key = jax.random.PRNGKey(0)
    kx, kw, kb = jax.random.split(key, 3)

    x = jax.random.normal(kx, (2, in_channels, 16, 16), jnp.float32)
    # ConvTranspose2d params: weight (Cin, Cout, K, K), bias (Cout,)
    fan = in_channels * kernel_size * kernel_size
    bound = 1.0 / np.sqrt(fan)
    weight = jax.random.uniform(
        kw, (in_channels, out_channels, kernel_size, kernel_size),
        jnp.float32, -bound, bound)
    bias = jax.random.uniform(kb, (out_channels,), jnp.float32, -bound, bound)

    out = jax.block_until_ready(
        upsample_forward(x, weight, bias, kernel_size, stride))

    # (1) Exactness of the phase decomposition (same bf16 operands, f32 accum).
    ref_bf16 = jax.block_until_ready(
        _reference(x, weight, bias, kernel_size, stride, cast_bf16=True))
    # (2) Fidelity to the f32 PyTorch module (bf16-operand tolerance).
    ref_f32 = jax.block_until_ready(
        _reference(x, weight, bias, kernel_size, stride, cast_bf16=False))

    assert out.shape == ref_f32.shape, (out.shape, ref_f32.shape)
    np.testing.assert_allclose(np.asarray(out), np.asarray(ref_bf16),
                               rtol=2e-3, atol=2e-3)
    np.testing.assert_allclose(np.asarray(out), np.asarray(ref_f32),
                               rtol=5e-2, atol=5e-2)

    print("KERNEL_OK")
</pallas_src>

<mosaic_0001>
module attributes {stable_mosaic.version = 11 : i64} {
  func.func @_upsample_kernel(%arg0: i32, %arg1: memref<1x16x384xbf16, #tpu.memory_space<vmem>>, %arg2: memref<32x16xbf16, #tpu.memory_space<vmem>>, %arg3: memref<32x1xf32, #tpu.memory_space<vmem>>, %arg4: memref<1x32x384xf32, #tpu.memory_space<vmem>>) attributes {dimension_semantics = [#tpu.dimension_semantics<parallel>], iteration_bounds = array<i64: 2>, scalar_prefetch = 0 : i64, scratch_operands = 0 : i64, tpu.core_type = #tpu.core_type<tc>, window_params = [{transform_indices = @transform_0, window_bounds = array<i64: 1, 16, 384>}, {pipeline_mode = #tpu.pipeline_mode<synchronous>, transform_indices = @transform_1, window_bounds = array<i64: 32, 16>}, {pipeline_mode = #tpu.pipeline_mode<synchronous>, transform_indices = @transform_2, window_bounds = array<i64: 32, 1>}, {transform_indices = @transform_3, window_bounds = array<i64: 1, 32, 384>}]} {
    %c0 = arith.constant 0 : index
    %c0_0 = arith.constant 0 : index
    %0 = vector.load %arg2[%c0, %c0_0] : memref<32x16xbf16, #tpu.memory_space<vmem>>, vector<32x16xbf16>
    %c0_1 = arith.constant 0 : index
    %c0_2 = arith.constant 0 : index
    %c0_3 = arith.constant 0 : index
    %1 = vector.load %arg1[%c0_1, %c0_2, %c0_3] : memref<1x16x384xbf16, #tpu.memory_space<vmem>>, vector<1x16x384xbf16>
    %2 = vector.shape_cast %1 : vector<1x16x384xbf16> to vector<16x384xbf16>
    %cst = arith.constant dense<0.000000e+00> : vector<32x384xf32>
    %3 = tpu.matmul %0, %2, %cst {dimension_numbers = #tpu.dot_dimension_numbers<[1], [0], [0], [1], [0, 0, 1, 1], [], []>} : vector<32x16xbf16>, vector<16x384xbf16>, vector<32x384xf32> -> vector<32x384xf32>
    %c0_4 = arith.constant 0 : index
    %c0_5 = arith.constant 0 : index
    %4 = vector.load %arg3[%c0_4, %c0_5] : memref<32x1xf32, #tpu.memory_space<vmem>>, vector<32x1xf32>
    %5 = vector.broadcast %4 : vector<32x1xf32> to vector<32x384xf32>
    %6 = arith.addf %3, %5 : vector<32x384xf32>
    %cst_6 = arith.constant 0.000000e+00 : f32
    %7 = vector.broadcast %cst_6 : f32 to vector<32x384xf32>
    %8 = arith.maximumf %6, %7 : vector<32x384xf32>
    %c0_7 = arith.constant 0 : index
    %c0_8 = arith.constant 0 : index
    %c0_9 = arith.constant 0 : index
    %9 = vector.load %arg4[%c0_7, %c0_8, %c0_9] : memref<1x32x384xf32, #tpu.memory_space<vmem>>, vector<1x32x384xf32>
    %10 = vector.shape_cast %9 : vector<1x32x384xf32> to vector<32x384xf32>
    %11 = vector.shape_cast %8 : vector<32x384xf32> to vector<1x32x384xf32>
    tpu.vector_store %arg4[%c0_7, %c0_8, %c0_9], %11 {strides = array<i32>} : memref<1x32x384xf32, #tpu.memory_space<vmem>>, vector<1x32x384xf32>,
    return
  }
  func.func @transform_0(%arg0: i32) -> (i32, i32, i32) {
    %c0_i32 = arith.constant 0 : i32
    %c0_i32_0 = arith.constant 0 : i32
    %c0_i32_1 = arith.constant 0 : i32
    return %arg0, %c0_i32, %c0_i32_0 : i32, i32, i32
  }
  func.func @transform_1(%arg0: i32) -> (i32, i32) {
    %c0_i32 = arith.constant 0 : i32
    %c0_i32_0 = arith.constant 0 : i32
    %c0_i32_1 = arith.constant 0 : i32
    return %c0_i32, %c0_i32_0 : i32, i32
  }
  func.func @transform_2(%arg0: i32) -> (i32, i32) {
    %c0_i32 = arith.constant 0 : i32
    %c0_i32_0 = arith.constant 0 : i32
    %c0_i32_1 = arith.constant 0 : i32
    return %c0_i32, %c0_i32_0 : i32, i32
  }
  func.func @transform_3(%arg0: i32) -> (i32, i32, i32) {
    %c0_i32 = arith.constant 0 : i32
    %c0_i32_0 = arith.constant 0 : i32
    %c0_i32_1 = arith.constant 0 : i32
    return %arg0, %c0_i32, %c0_i32_0 : i32, i32, i32
  }
}

</mosaic_0001>

<llo_original>
// kernel: tile.8
$region0: #{tile.8}
  #allocation2 [shape = 's32[1]{0}', space=sflag, size = 0x4, scoped, tag = 'scoped memory for tile.8']
  %s0 = inlined_call_operand.hbm [shape: f32[8], index: 0, kind: input, shape index: {}]
  %s1 = inlined_call_operand.vmem [shape: f32[4,8], index: 1, kind: output, shape index: {}]
  $region1: #{tile.8} parent=0
    #allocation0 [shape = 'u8[512]{0}', space=vmem, size = 0x400, scoped, tag = 'operand span for operand 0']
    #allocation1 [shape = 's32[1]{0}', space=sflag, size = 0x4, scoped, tag = 'scoped memory for tile.8']
    %2 = vsyncpa [#allocation1], 0
    // Predicated region
    $region2: #{tile.8} parent=1 // pred_check
      _
    $region3: #{tile.8} parent=1 // pred_check_branch
      %4 = sbr.rel (0) target = $region5
    $region4: #{tile.8} parent=1 // pred_region
      %s6 = ssub.s32 16, 16
      %7 = vsyncadd [#allocation1], %s6
      %s9 = sshll.u32 [#allocation0], 4
      %s10 = int_to_ptr.vmem [resolvable:$true] %s9
      %12 = dma.hbm_to_vmem [thread:$0]  %s0, 16, %s10, [#allocation1]
    $region5: #{tile.8} parent=1 // pred_fallthru
      _
    // Predicated region
    $region6: #{tile.8} parent=1 // pred_check
      _
    $region7: #{tile.8} parent=1 // pred_check_branch
      %14 = sbr.rel (0) target = $region9
    $region8: #{tile.8} parent=1 // pred_region
      %15 = dma.done [#allocation1], 16
    $region9: #{tile.8} parent=1 // pred_fallthru
      _
    %v16 = vld [vmem:[#allocation0] ss:$0 sm:$0xff]
    %17 = vst [vmem:[%s1] sm:$0xf] %v16
    %18 = vsyncpa [#allocation1], 1

// kernel: tile.0
$region0: #{tile.0}
  %s0 = inlined_call_operand.vmem [shape: f32[4,8], index: 0, kind: input, shape index: {}]
  %s1 = inlined_call_operand.vmem [shape: f32[32,1], index: 1, kind: output, shape index: {}]
  $region1: #{tile.0} parent=0
    #allocation0 [shape = 'u8[4096]{0}', space=vmem, size = 0x1000, scoped, tag = 'scoped mem for input reshape']
    %s3 = sshllo.u32 0, 4
    %v4 = vld [vmem:[%s0] sm:%s3]
    %5 = vst [vmem:[#allocation0] sm:%s3] %v4
    %v6 = vld [vmem:[#allocation0] sm:$0xf]
    %vm7 = vcmask 7168
    %8 = vst.msk [vmem:[%s1] ss:$8 sm:$0xf] %vm7, %v6
    %v9 = vld [vmem:[#allocation0] sm:$0xf]
    %10 = vrot.lane.b32.xlu0 %v9, 127
    %v11 = vpop.permute.xlu0 %10
    %vm12 = vcmask 7168
    %s13 = scalar_lea.vmem %s1, 1
    %14 = vst.msk [vmem:[%s13] ss:$8 sm:$0xf] %vm12, %v11
    %v15 = vld [vmem:[#allocation0] sm:$0xf]
    %16 = vrot.lane.b32.xlu0 %v15, 126
    %v17 = vpop.permute.xlu0 %16
    %vm18 = vcmask 7168
    %s19 = scalar_lea.vmem %s1, 2
    %20 = vst.msk [vmem:[%s19] ss:$8 sm:$0xf] %vm18, %v17
    %v21 = vld [vmem:[#allocation0] sm:$0xf]
    %22 = vrot.lane.b32.xlu0 %v21, 125
    %v23 = vpop.permute.xlu0 %22
    %vm24 = vcmask 7168
    %s25 = scalar_lea.vmem %s1, 3
    %26 = vst.msk [vmem:[%s25] ss:$8 sm:$0xf] %vm24, %v23
    %v27 = vld [vmem:[#allocation0] sm:$0xf]
    %28 = vrot.lane.b32.xlu0 %v27, 124
    %v29 = vpop.permute.xlu0 %28
    %vm30 = vcmask 7168
    %s31 = scalar_lea.vmem %s1, 4
    %32 = vst.msk [vmem:[%s31] ss:$8 sm:$0xf] %vm30, %v29
    %v33 = vld [vmem:[#allocation0] sm:$0xf]
    %34 = vrot.lane.b32.xlu0 %v33, 123
    %v35 = vpop.permute.xlu0 %34
    %vm36 = vcmask 7168
    %s37 = scalar_lea.vmem %s1, 5
    %38 = vst.msk [vmem:[%s37] ss:$8 sm:$0xf] %vm36, %v35
    %v39 = vld [vmem:[#allocation0] sm:$0xf]
    %40 = vrot.lane.b32.xlu0 %v39, 122
    %v41 = vpop.permute.xlu0 %40
    %vm42 = vcmask 7168
    %s43 = scalar_lea.vmem %s1, 6
    %44 = vst.msk [vmem:[%s43] ss:$8 sm:$0xf] %vm42, %v41
    %v45 = vld [vmem:[#allocation0] sm:$0xf]
    %46 = vrot.lane.b32.xlu0 %v45, 121
    %v47 = vpop.permute.xlu0 %46
    %vm48 = vcmask 7168
    %s49 = scalar_lea.vmem %s1, 7
    %50 = vst.msk [vmem:[%s49] ss:$8 sm:$0xf] %vm48, %v47

// kernel: upsample_forward.1
$region0: #{upsample_forward.1}
  #allocation0 [shape = 'u32[]', space=smem, size = 0x4, offset = 0x4, fixed_abs, tag = 'smem constant byte address 0x4 - core index']
  #allocation1 [shape = 'u32[144,128]{1,0:T(1,128)}', space=vmem, size = 0x12000, scoped, tag = 'internal scratch']
  %s0 = inlined_call_operand.vmem [shape: bf16[2,16,384], index: 0, kind: input, shape index: {}]
  %s1 = inlined_call_operand.vmem [shape: bf16[32,16], index: 1, kind: input, shape index: {}]
  %s2 = inlined_call_operand.vmem [shape: f32[32,1], index: 2, kind: input, shape index: {}]
  %s3 = inlined_call_operand.vmem [shape: f32[2,32,384], index: 3, kind: output, shape index: {}]
  %s4 = sld [smem:[#allocation0]]
  $region45: #{upsample_forward.1} parent=0
    _
  %s6 = ssub.s32 1, %s4
  %s7 = scalar_select 0, %s6, %s4
  loop: start=0, step=1, limit=4
  $region2: #{upsample_forward.1} parent=0 // loop_pre_header
    _
  $region3: #{upsample_forward.1} parent=0 // loop_header
    %s9 = sphi 0, %s13
    %p10 = scmp.ge.s32.totalorder %s9, 4
    %s19 = sphi 0, %s21
    %s22 = sphi 0, %s19
    %s23 = sphi 0, %s22
    %s39 = sphi 0, %s23
    %s43 = sphi 0, %s43
    %s45 = sphi 0, %s43
    %s46 = sphi 0, %s45
    %s60 = sphi 0, %s46
    %s64 = sphi 0, %s64
    %s66 = sphi 0, %s64
    %s67 = sphi 0, %s66
    %s81 = sphi 0, %s67
    %s87 = sphi 0, %s89
    %s90 = sphi 0, %s87
    %s91 = sphi 0, %s90
    %s107 = sphi 0, %s91
  $region4: #{upsample_forward.1} parent=0 // loop_header_branch
    %12 = sbr.rel (%p10) target = $region8
  $region5: #{upsample_forward.1} parent=0 // loop_body
    %s14 = ssub.s32 %s9, 1
    %s15 = ssub.s32 %s9, 2
    %s16 = sadd.s32 %s9, 1
    %s17 = ssub.s32 %s9, %s16
    %p18 = scmp.eq.s32.totalorder %s17, 0
    %s20 = sadd.s32 %s19, 1
    %s21 = scalar_select %p18, %s19, %s20
    %p24 = pneg %p18
    %p25 = scmp.eq.s32.totalorder %s9, 1
    %p26 = por %p24, %p25
    %p27 = scmp.ne.s32.totalorder %s19, %s22
    %p28 = scmp.eq.s32.totalorder %s9, 0
    %p29 = por %p27, %p28
    %p30 = scmp.ne.s32.totalorder %s19, %s22
    %p31 = scmp.eq.s32.totalorder %s14, 1
    %p32 = por %p30, %p31
    %p33 = scmp.ne.s32.totalorder %s22, %s23
    %p34 = scmp.eq.s32.totalorder %s14, 0
    %p35 = por %p33, %p34
    %p36 = scmp.ne.s32.totalorder %s22, %s23
    %p37 = scmp.eq.s32.totalorder %s15, 1
    %p38 = por %p36, %p37
    %p40 = scmp.ne.s32.totalorder %s23, %s39
    %p41 = scmp.eq.s32.totalorder %s15, 0
    %p42 = por %p40, %p41
    %s44 = sadd.s32 %s43, 1
    %p47 = scmp.eq.s32.totalorder %s9, 1
    %p48 = scmp.ne.s32.totalorder %s43, %s45
    %p49 = scmp.eq.s32.totalorder %s9, 0
    %p50 = por %p48, %p49
    %p51 = scmp.ne.s32.totalorder %s43, %s45
    %p52 = scmp.eq.s32.totalorder %s14, 1
    %p53 = por %p51, %p52
    %p54 = scmp.ne.s32.totalorder %s45, %s46
    %p55 = scmp.eq.s32.totalorder %s14, 0
    %p56 = por %p54, %p55
    %p57 = scmp.ne.s32.totalorder %s45, %s46
    %p58 = scmp.eq.s32.totalorder %s15, 1
    %p59 = por %p57, %p58
    %p61 = scmp.ne.s32.totalorder %s46, %s60
    %p62 = scmp.eq.s32.totalorder %s15, 0
    %p63 = por %p61, %p62
    %s65 = sadd.s32 %s64, 1
    %p68 = scmp.eq.s32.totalorder %s9, 1
    %p69 = scmp.ne.s32.totalorder %s64, %s66
    %p70 = scmp.eq.s32.totalorder %s9, 0
    %p71 = por %p69, %p70
    %p72 = scmp.ne.s32.totalorder %s64, %s66
    %p73 = scmp.eq.s32.totalorder %s14, 1
    %p74 = por %p72, %p73
    %p75 = scmp.ne.s32.totalorder %s66, %s67
    %p76 = scmp.eq.s32.totalorder %s14, 0
    %p77 = por %p75, %p76
    %p78 = scmp.ne.s32.totalorder %s66, %s67
    %p79 = scmp.eq.s32.totalorder %s15, 1
    %p80 = por %p78, %p79
    %p82 = scmp.ne.s32.totalorder %s67, %s81
    %p83 = scmp.eq.s32.totalorder %s15, 0
    %p84 = por %p82, %p83
    %s85 = ssub.s32 %s9, %s16
    %p86 = scmp.eq.s32.totalorder %s85, 0
    %s88 = sadd.s32 %s87, 1
    %s89 = scalar_select %p86, %s87, %s88
    %p92 = pneg %p86
    %p93 = scmp.eq.s32.totalorder %s9, 1
    %p94 = por %p92, %p93
    %p95 = scmp.ne.s32.totalorder %s87, %s90
    %p96 = scmp.eq.s32.totalorder %s9, 0
    %p97 = por %p95, %p96
    %p98 = scmp.ne.s32.totalorder %s87, %s90
    %p99 = scmp.eq.s32.totalorder %s14, 1
    %p100 = por %p98, %p99
    %p101 = scmp.ne.s32.totalorder %s90, %s91
    %p102 = scmp.eq.s32.totalorder %s14, 0
    %p103 = por %p101, %p102
    %p104 = scmp.ne.s32.totalorder %s90, %s91
    %p105 = scmp.eq.s32.totalorder %s15, 1
    %p106 = por %p104, %p105
    %p108 = scmp.ne.s32.totalorder %s91, %s107
    %p109 = scmp.eq.s32.totalorder %s15, 0
    %p110 = por %p108, %p109
    %p111 = scmp.le.s32.totalorder 1, %s9
    %p112 = scmp.lt.s32.totalorder %s9, 3
    %p113 = pnand %p111, %p112
    %p114 = pneg %p113
    // Predicated region
    $region9: #{upsample_forward.1} parent=5 // pred_check
      _
    $region10: #{upsample_forward.1} parent=5 // pred_check_branch
      %116 = sbr.rel (%p113) target = $region12
    $region11: #{upsample_forward.1} parent=5 // pred_region
      %s117 = ssub.s32 %s9, 1
      // Predicated region
      $region13: #{upsample_forward.1} parent=11 // pred_check
        %p118 = pneg %p56
      $region14: #{upsample_forward.1} parent=11 // pred_check_branch
        %120 = sbr.rel (%p118) target = $region16
      $region15: #{upsample_forward.1} parent=11 // pred_region
        _
      $region16: #{upsample_forward.1} parent=11 // pred_fallthru
        _
      // Predicated region
      $region17: #{upsample_forward.1} parent=11 // pred_check
        %p121 = pneg %p77
      $region18: #{upsample_forward.1} parent=11 // pred_check_branch
        %123 = sbr.rel (%p121) target = $region20
      $region19: #{upsample_forward.1} parent=11 // pred_region
        _
      $region20: #{upsample_forward.1} parent=11 // pred_fallthru
        _
    $region12: #{upsample_forward.1} parent=5 // pred_fallthru
      _
    %p124 = scmp.lt.s32.totalorder %s9, 2
    // Predicated region
    $region21: #{upsample_forward.1} parent=5 // pred_check
      %p125 = pneg %p124
    $region22: #{upsample_forward.1} parent=5 // pred_check_branch
      %127 = sbr.rel (%p125) target = $region24
    $region23: #{upsample_forward.1} parent=5 // pred_region
      // Predicated region
      $region25: #{upsample_forward.1} parent=23 // pred_check
        %p128 = pneg %p29
      $region26: #{upsample_forward.1} parent=23 // pred_check_branch
        %130 = sbr.rel (%p128) target = $region28
      $region27: #{upsample_forward.1} parent=23 // pred_region
        %p131 = scmp.lt.s32.totalorder %s9, 1
        %s132 = scalar_select %p131, %s9, 1
        %s133 = smul.addr %s132, 6
        %s134 = smul.addr %s133, 4
        %s135 = scalar_lea.vmem %s0, %s134
      $region28: #{upsample_forward.1} parent=23 // pred_fallthru
        _
    $region24: #{upsample_forward.1} parent=5 // pred_fallthru
      _
    %p136 = scmp.le.s32.totalorder 1, %s9
    %p137 = scmp.lt.s32.totalorder %s9, 3
    %p138 = pnand %p136, %p137
    %p139 = pneg %p138
    // Predicated region
    $region29: #{upsample_forward.1} parent=5 // pred_check
      _
    $region30: #{upsample_forward.1} parent=5 // pred_check_branch
      %141 = sbr.rel (%p138) target = $region32
    $region31: #{upsample_forward.1} parent=5 // pred_region
      %s142 = ssub.s32 %s9, 1
      %p143 = scmp.lt.s32.totalorder %s14, 1
      %s144 = scalar_select %p143, %s14, 1
      %s145 = smul.addr %s144, 6
      %s146 = smul.addr %s145, 4
      %s147 = scalar_lea.vmem %s0, %s146
      %p148 = pneg %p35
      %p149 = pneg %p32
      %p150 = pneg %p56
      %p151 = pneg %p53
      %p152 = pneg %p77
      %p153 = pneg %p74
      %p154 = pneg %p103
      %p155 = pneg %p100
      %p156 = scmp.lt.s32.totalorder %s14, 1
      %s157 = scalar_select %p156, %s14, 1
      %s158 = smul.addr %s157, 12
      %s159 = smul.addr %s158, 8
      %s160 = scalar_lea.vmem %s3, %s159
      %p161 = scmp.lt.s32.totalorder %s14, 1
      %s162 = scalar_select %p161, %s14, 1
      %s163 = smul.addr %s162, 6
      %s164 = smul.addr %s163, 4
      %s165 = scalar_lea.vmem %s0, %s164
      %p166 = scmp.lt.s32.totalorder %s14, 1
      %s167 = scalar_select %p166, %s14, 1
      %s168 = smul.addr %s167, 12
      %s169 = smul.addr %s168, 8
      %s170 = scalar_lea.vmem %s3, %s169
      %v172 = vld [vmem:[%s1] sm:$0xf]
      %v173 = vld [vmem:[%s1 + $0x4] sm:$0xf]
      %v174 = vld [vmem:[%s1 + $0x8] sm:$0xf]
      %v175 = vld [vmem:[%s1 + $0xc] sm:$0xf]
      %v176 = vld [vmem:[%s165] sm:$0xff]
      %v177 = vld [vmem:[%s165 + $0x8] sm:$0xf]
      %v178 = vld [vmem:[%s165 + $0xc] sm:$0xff]
      %v179 = vld [vmem:[%s165 + $0x14] sm:$0xf]
      %v180 = vld [vmem:[%s2] sm:$0xff]
      %v181 = vld [vmem:[%s2 + $0x8] sm:$0xff]
      %v182 = vld [vmem:[%s2 + $0x10] sm:$0xff]
      %v183 = vld [vmem:[%s2 + $0x18] sm:$0xff]
      %185 = vset.pattern.permute.xlu0 0
      %186 = vperm.xlu0 %185, %v180
      %v187 = vpop.permute.xlu0 %186
      %190 = vset.pattern.permute.xlu0 0
      %191 = vperm.xlu0 %190, %v181
      %v192 = vpop.permute.xlu0 %191
      %195 = vset.pattern.permute.xlu0 0
      %196 = vperm.xlu0 %195, %v182
      %v197 = vpop.permute.xlu0 %196
      %200 = vset.pattern.permute.xlu0 0
      %201 = vperm.xlu0 %200, %v183
      %v202 = vpop.permute.xlu0 %201
      %v208 = vunpack.c.l.b16 %v172
      %v209 = vunpack.c.l.b16 %v173
      %v210 = vunpack.c.l.b16 %v174
      %v211 = vunpack.c.l.b16 %v175
      %v212 = vpack.c.b16 %v209, %v208
      %v213 = vpack.c.b16 %v211, %v210
      %v218 = vunpack.c.l.b16 %v176
      %v219 = vunpack.c.h.b16 %v176
      %v220 = vunpack.c.l.b16 %v177
      %v221 = vunpack.c.l.b16 %v178
      %v222 = vunpack.c.h.b16 %v178
      %v223 = vunpack.c.l.b16 %v179
      %v224 = vpack.c.b16 %v221, %v218
      %v225 = vpack.c.b16 %v222, %v219
      %v226 = vpack.c.b16 %v223, %v220
      %vm230 = vcmask 130048
      %v232 = vsel %vm230, %v212, 0
      %v235 = vsel %vm230, %v213, 0
      %237 = vmatprep.subr.bf16.mxu0 %v225
      %238 = vmatpush1.bf16.msra.mxu0 %v224
      %239 = vmatprep.subr.bf16.mxu0 0
      %240 = vmatpush1.bf16.msra.mxu0 0
      %241 = vmatprep.subr.bf16.mxu0 0
      %242 = vmatpush1.bf16.msra.mxu0 0
      %243 = vmatprep.subr.bf16.mxu0 0
      %244 = vmatpush1.bf16.msra.mxu0 0
      %245 = vmatprep.subr.bf16.mxu0 0
      %246 = vmatpush1.bf16.msra.mxu0 0
      %247 = vmatprep.subr.bf16.mxu0 0
      %248 = vmatpush1.bf16.msra.mxu0 0
      %249 = vmatprep.subr.bf16.mxu0 0
      %250 = vmatpush1.bf16.msra.mxu0 0
      %251 = vmatprep.subr.bf16.mxu0 0
      %252 = vmatpush1.bf16.msra.mxu0 0
      %253 = vmatprep.subr.bf16.mxu0 0
      %254 = vmatpush1.bf16.msra.mxu0 0
      %255 = vmatprep.subr.bf16.mxu0 0
      %256 = vmatpush1.bf16.msra.mxu0 0
      %257 = vmatprep.subr.bf16.mxu0 0
      %258 = vmatpush1.bf16.msra.mxu0 0
      %259 = vmatprep.subr.bf16.mxu0 0
      %260 = vmatpush1.bf16.msra.mxu0 0
      %261 = vmatprep.subr.bf16.mxu0 0
      %262 = vmatpush1.bf16.msra.mxu0 0
      %263 = vmatprep.subr.bf16.mxu0 0
      %264 = vmatpush1.bf16.msra.mxu0 0
      %265 = vmatprep.subr.bf16.mxu0 0
      %266 = vmatpush1.bf16.msra.mxu0 0
      %267 = vmatprep.subr.bf16.mxu0 0
      %268 = vmatpush1.bf16.msra.mxu0 0
      %269 = vmatprep.mubr.bf16.mxu0 0
      %270 = vmatmul.mubr.bf16.gmra.mrb[0].mxu0 %v232
      %v271 = vpop.f32.mrb[0].mxu0
      %v272 = vadd.f32 %v187, %v271
      %v273 = vpop.f32.mrb[0].mxu0
      %v274 = vadd.f32 %v187, %v273
      %v275 = vpop.f32.mrb[0].mxu0
      %v276 = vadd.f32 %v192, %v275
      %v277 = vpop.f32.mrb[0].mxu0
      %v278 = vadd.f32 %v192, %v277
      %279 = vmatprep.mubr.bf16.mxu0 0
      %280 = vmatmul.mubr.bf16.gmra.mrb[0].mxu0 %v235
      %v281 = vpop.f32.mrb[0].mxu0
      %v282 = vadd.f32 %v197, %v281
      %v283 = vpop.f32.mrb[0].mxu0
      %v284 = vadd.f32 %v197, %v283
      %v285 = vpop.f32.mrb[0].mxu0
      %v286 = vadd.f32 %v202, %v285
      %v287 = vpop.f32.mrb[0].mxu0
      %v288 = vadd.f32 %v202, %v287
      %289 = vdwg.mxu0
      %290 = vmatprep.subr.bf16.mxu0 0
      %291 = vmatpush1.bf16.msra.mxu0 %v226
      %292 = vmatprep.subr.bf16.mxu0 0
      %293 = vmatpush1.bf16.msra.mxu0 0
      %294 = vmatprep.subr.bf16.mxu0 0
      %295 = vmatpush1.bf16.msra.mxu0 0
      %296 = vmatprep.subr.bf16.mxu0 0
      %297 = vmatpush1.bf16.msra.mxu0 0
      %298 = vmatprep.subr.bf16.mxu0 0
      %299 = vmatpush1.bf16.msra.mxu0 0
      %300 = vmatprep.subr.bf16.mxu0 0
      %301 = vmatpush1.bf16.msra.mxu0 0
      %302 = vmatprep.subr.bf16.mxu0 0
      %303 = vmatpush1.bf16.msra.mxu0 0
      %304 = vmatprep.subr.bf16.mxu0 0
      %305 = vmatpush1.bf16.msra.mxu0 0
      %306 = vmatprep.subr.bf16.mxu0 0
      %307 = vmatpush1.bf16.msra.mxu0 0
      %308 = vmatprep.subr.bf16.mxu0 0
      %309 = vmatpush1.bf16.msra.mxu0 0
      %310 = vmatprep.subr.bf16.mxu0 0
      %311 = vmatpush1.bf16.msra.mxu0 0
      %312 = vmatprep.subr.bf16.mxu0 0
      %313 = vmatpush1.bf16.msra.mxu0 0
      %314 = vmatprep.subr.bf16.mxu0 0
      %315 = vmatpush1.bf16.msra.mxu0 0
      %316 = vmatprep.subr.bf16.mxu0 0
      %317 = vmatpush1.bf16.msra.mxu0 0
      %318 = vmatprep.subr.bf16.mxu0 0
      %319 = vmatpush1.bf16.msra.mxu0 0
      %320 = vmatprep.subr.bf16.mxu0 0
      %321 = vmatpush1.bf16.msra.mxu0 0
      %322 = vmatprep.mubr.bf16.mxu0 0
      %323 = vmatmul.mubr.bf16.gmra.mrb[0].mxu0 %v232
      %v324 = vpop.f32.mrb[0].mxu0
      %v325 = vadd.f32 %v187, %v324
      %v326 = vpop.f32.mrb[0].mxu0
      %v327 = vpop.f32.mrb[0].mxu0
      %v328 = vadd.f32 %v192, %v327
      %v329 = vpop.f32.mrb[0].mxu0
      %330 = vmatprep.mubr.bf16.mxu0 0
      %331 = vmatmul.mubr.bf16.gmra.mrb[0].mxu0 %v235
      %v332 = vpop.f32.mrb[0].mxu0
      %v333 = vadd.f32 %v197, %v332
      %v334 = vpop.f32.mrb[0].mxu0
      %v335 = vpop.f32.mrb[0].mxu0
      %v336 = vadd.f32 %v202, %v335
      %v337 = vpop.f32.mrb[0].mxu0
      %338 = vdwg.mxu0
      %v339 = vmax.f32 %v272, 0.0
      %v340 = vmax.f32 %v274, 0.0
      %v341 = vmax.f32 %v325, 0.0
      %v342 = vmax.f32 %v276, 0.0
      %v343 = vmax.f32 %v278, 0.0
      %v344 = vmax.f32 %v328, 0.0
      %v345 = vmax.f32 %v282, 0.0
      %v346 = vmax.f32 %v284, 0.0
      %v347 = vmax.f32 %v333, 0.0
      %v348 = vmax.f32 %v286, 0.0
      %v349 = vmax.f32 %v288, 0.0
      %v350 = vmax.f32 %v336, 0.0
      %351 = vst [vmem:[%s170] sm:$0xff] %v339
      %352 = vst [vmem:[%s170 + $0x8] sm:$0xff] %v340
      %353 = vst [vmem:[%s170 + $0x10] sm:$0xff] %v341
      %354 = vst [vmem:[%s170 + $0x18] sm:$0xff] %v342
      %355 = vst [vmem:[%s170 + $0x20] sm:$0xff] %v343
      %356 = vst [vmem:[%s170 + $0x28] sm:$0xff] %v344
      %357 = vst [vmem:[%s170 + $0x30] sm:$0xff] %v345
      %358 = vst [vmem:[%s170 + $0x38] sm:$0xff] %v346
      %359 = vst [vmem:[%s170 + $0x40] sm:$0xff] %v347
      %360 = vst [vmem:[%s170 + $0x48] sm:$0xff] %v348
      %361 = vst [vmem:[%s170 + $0x50] sm:$0xff] %v349
      %362 = vst [vmem:[%s170 + $0x58] sm:$0xff] %v350
      %p363 = scmp.lt.s32.totalorder %s14, 1
      %s364 = scalar_select %p363, %s14, 1
      %s365 = smul.addr %s364, 12
      %s366 = smul.addr %s365, 8
      %s367 = scalar_lea.vmem %s3, %s366
      // Predicated region
      $region33: #{upsample_forward.1} parent=31 // pred_check
        %p368 = pneg %p100
      $region34: #{upsample_forward.1} parent=31 // pred_check_branch
        %370 = sbr.rel (%p368) target = $region36
      $region35: #{upsample_forward.1} parent=31 // pred_region
        _
      $region36: #{upsample_forward.1} parent=31 // pred_fallthru
        _
    $region32: #{upsample_forward.1} parent=5 // pred_fallthru
      _
    %p371 = scmp.le.s32.totalorder 2, %s9
    // Predicated region
    $region37: #{upsample_forward.1} parent=5 // pred_check
      %p372 = pneg %p371
    $region38: #{upsample_forward.1} parent=5 // pred_check_branch
      %374 = sbr.rel (%p372) target = $region40
    $region39: #{upsample_forward.1} parent=5 // pred_region
      %s375 = ssub.s32 %s9, 2
      // Predicated region
      $region41: #{upsample_forward.1} parent=39 // pred_check
        %p376 = pneg %p106
      $region42: #{upsample_forward.1} parent=39 // pred_check_branch
        %378 = sbr.rel (%p376) target = $region44
      $region43: #{upsample_forward.1} parent=39 // pred_region
        %p379 = scmp.lt.s32.totalorder %s15, 1
        %s380 = scalar_select %p379, %s15, 1
        %s381 = smul.addr %s380, 12
        %s382 = smul.addr %s381, 8
        %s383 = scalar_lea.vmem %s3, %s382
      $region44: #{upsample_forward.1} parent=39 // pred_fallthru
        _
    $region40: #{upsample_forward.1} parent=5 // pred_fallthru
      _
  $region6: #{upsample_forward.1} parent=0 // loop_footer
    %s13 = sadd.s32 1, %s9
  $region7: #{upsample_forward.1} parent=0 // loop_footer_branch
    %8 = sbr.rel target = $region3
  $region8: #{upsample_forward.1} parent=0 // loop_exit
    _

</llo_original>
